<compile_context>
chip_gen: v5e
topology: v5e:2x2
jax: 0.10.0
libtpu: 0.0.40
codegen_flags: <defaults>
</compile_context>

<pallas_src>
import functools

import jax
import jax.numpy as jnp
from jax.experimental import pallas as pl
from jax.experimental.pallas import tpu as pltpu

LANE = 128
SUBLANE = 8
# 2048 * 128 * 4 B = 1 MiB per f32 buffer; with double-buffered input+output
# that is ~4 MiB of VMEM -> safe on v5e (16 MiB scoped default) and v7x (64 MiB).
MAX_TILE_ROWS = 2048


def _int_pow(x, k: int):
    """x**k for a small static non-negative integer k (binary exponentiation)."""
    if k == 0:
        return jnp.ones_like(x)
    result = None
    base = x
    while k > 0:
        if k & 1:
            result = base if result is None else result * base
        k >>= 1
        if k:
            base = base * base
    return result


def _envelope_kernel(x_ref, o_ref, *, p: int, a: float, b: float, c: float):
    # Load in storage dtype, compute in f32 (keeps HBM traffic at the input
    # width; exact for f32 inputs).
    x = x_ref[...].astype(jnp.float32)

    # 1/x: EUP approximate reciprocal (separate VLIW slot, ~free) plus two
    # Newton-Raphson refinements -> f32-accurate well below 1e-5 tolerance.
    r = pl.reciprocal(x, approx=True)
    r = r * (2.0 - x * r)
    r = r * (2.0 - x * r)

    # a*x^(p-1) + b*x^p + c*x^(p+1) == x^(p-1) * (a + x*(b + c*x))
    x_pow = _int_pow(x, p - 1)
    env = r + x_pow * (a + x * (b + c * x))

    out = jnp.where(x < 1.0, env, 0.0)
    o_ref[...] = out.astype(o_ref.dtype)


def envelope_pallas(x: jax.Array, exponent: int) -> jax.Array:
    """Apply the DimeNet++ Envelope elementwise. Returns same shape/dtype as x."""
    p = exponent + 1
    a = -(p + 1) * (p + 2) / 2.0
    b = float(p * (p + 2))
    c = -p * (p + 1) / 2.0

    orig_shape = x.shape
    dtype = x.dtype

    flat = x.reshape(-1)
    n = flat.shape[0]

    # Rows of the lane-dense [rows, 128] slab: multiple of 8 (sublane) and of
    # tile_rows, so grid * tile_rows == rows and every row is written.
    rows_needed = max(SUBLANE, -(-n // LANE))
    rows_needed = -(-rows_needed // SUBLANE) * SUBLANE
    if rows_needed <= MAX_TILE_ROWS:
        tile_rows = rows_needed          # single block: one DMA in / compute / DMA out
        rows = rows_needed
    else:
        tile_rows = MAX_TILE_ROWS
        rows = -(-rows_needed // tile_rows) * tile_rows

    padded = rows * LANE
    if padded != n:
        # Pad with 2.0 (>= 1.0, masked to 0 by the envelope) so padded lanes
        # never hit 1/0; they are sliced away afterwards.
        flat = jnp.pad(flat, (0, padded - n),
                       constant_values=jnp.asarray(2.0, dtype))
    slab = flat.reshape(rows, LANE)      # contiguous reshape: no extra HBM pass

    kernel = functools.partial(_envelope_kernel, p=p, a=a, b=b, c=c)

    out = pl.pallas_call(
        kernel,
        out_shape=jax.ShapeDtypeStruct((rows, LANE), dtype),
        grid_spec=pltpu.PrefetchScalarGridSpec(
            num_scalar_prefetch=0,
            grid=(rows // tile_rows,),
            in_specs=[pl.BlockSpec((tile_rows, LANE), lambda i: (i, 0))],
            out_specs=pl.BlockSpec((tile_rows, LANE), lambda i: (i, 0)),
        ),
        compiler_params=pltpu.CompilerParams(
            dimension_semantics=("parallel",),   # shards grid across v7x's 2 TCs
        ),
    )(slab)

    out_flat = out.reshape(-1)
    if padded != n:
        out_flat = out_flat[:n]
    return out_flat.reshape(orig_shape)


def envelope_ref(x: jax.Array, exponent: int) -> jax.Array:
    """Pure-JAX reference matching the PyTorch forward."""
    p = exponent + 1
    a = -(p + 1) * (p + 2) / 2.0
    b = float(p * (p + 2))
    c = -p * (p + 1) / 2.0
    x_pow_p0 = x ** (p - 1)
    x_pow_p1 = x_pow_p0 * x
    x_pow_p2 = x_pow_p1 * x
    return (1.0 / x + a * x_pow_p0 + b * x_pow_p1 + c * x_pow_p2) * (x < 1.0).astype(x.dtype)


if __name__ == "__main__":
    key = jax.random.PRNGKey(0)
    exponent = 5  # DimeNet++ default envelope_exponent

    # DimeNet++ feeds normalized edge distances (dist / cutoff), typically in
    # (0, ~1.2]. Small 1-D edge vector like the model would produce.
    k1, k2 = jax.random.split(key)
    x1 = jax.random.uniform(k1, (200,), dtype=jnp.float32, minval=0.05, maxval=1.2)
    # Second small case with a ragged / multi-dim shape to exercise the
    # pad + slice path and shape restoration.
    x2 = jax.random.uniform(k2, (4, 777), dtype=jnp.float32, minval=0.05, maxval=1.2)

    for x in (x1, x2):
        out = jax.block_until_ready(envelope_pallas(x, exponent))
        ref = envelope_ref(x, exponent)
        assert out.shape == x.shape and out.dtype == x.dtype
        assert jnp.allclose(out, ref, rtol=1e-5, atol=1e-5), (
            f"max err {jnp.max(jnp.abs(out - ref))}")

    print("KERNEL_OK")
</pallas_src>

<mosaic_0001>
module attributes {stable_mosaic.version = 11 : i64} {
  func.func @_envelope_kernel(%arg0: i32, %arg1: memref<8x128xf32, #tpu.memory_space<vmem>>, %arg2: memref<8x128xf32, #tpu.memory_space<vmem>>) attributes {dimension_semantics = [#tpu.dimension_semantics<parallel>], iteration_bounds = array<i64: 1>, scalar_prefetch = 0 : i64, scratch_operands = 0 : i64, tpu.core_type = #tpu.core_type<tc>, window_params = [{transform_indices = @transform_0, window_bounds = array<i64: 8, 128>}, {transform_indices = @transform_1, window_bounds = array<i64: 8, 128>}]} {
    %c0 = arith.constant 0 : index
    %c0_0 = arith.constant 0 : index
    %0 = vector.load %arg1[%c0, %c0_0] : memref<8x128xf32, #tpu.memory_space<vmem>>, vector<8x128xf32>
    %1 = tpu.reciprocal %0 {approx = true} : vector<8x128xf32> -> vector<8x128xf32>
    %2 = arith.mulf %0, %1 : vector<8x128xf32>
    %cst = arith.constant 2.000000e+00 : f32
    %3 = vector.broadcast %cst : f32 to vector<8x128xf32>
    %4 = arith.subf %3, %2 : vector<8x128xf32>
    %5 = arith.mulf %1, %4 : vector<8x128xf32>
    %6 = arith.mulf %0, %5 : vector<8x128xf32>
    %cst_1 = arith.constant 2.000000e+00 : f32
    %7 = vector.broadcast %cst_1 : f32 to vector<8x128xf32>
    %8 = arith.subf %7, %6 : vector<8x128xf32>
    %9 = arith.mulf %5, %8 : vector<8x128xf32>
    %10 = arith.mulf %0, %0 : vector<8x128xf32>
    %11 = arith.mulf %10, %10 : vector<8x128xf32>
    %12 = arith.mulf %0, %11 : vector<8x128xf32>
    %cst_2 = arith.constant -2.100000e+01 : f32
    %13 = vector.broadcast %cst_2 : f32 to vector<8x128xf32>
    %14 = arith.mulf %13, %0 : vector<8x128xf32>
    %cst_3 = arith.constant 4.800000e+01 : f32
    %15 = vector.broadcast %cst_3 : f32 to vector<8x128xf32>
    %16 = arith.addf %15, %14 : vector<8x128xf32>
    %17 = arith.mulf %0, %16 : vector<8x128xf32>
    %cst_4 = arith.constant -2.800000e+01 : f32
    %18 = vector.broadcast %cst_4 : f32 to vector<8x128xf32>
    %19 = arith.addf %18, %17 : vector<8x128xf32>
    %20 = arith.mulf %12, %19 : vector<8x128xf32>
    %21 = arith.addf %9, %20 : vector<8x128xf32>
    %cst_5 = arith.constant 1.000000e+00 : f32
    %22 = vector.broadcast %cst_5 : f32 to vector<8x128xf32>
    %23 = arith.cmpf olt, %0, %22 : vector<8x128xf32>
    %cst_6 = arith.constant 0.000000e+00 : f32
    %24 = vector.broadcast %cst_6 : f32 to vector<8x128xf32>
    %25 = arith.select %23, %21, %24 : vector<8x128xi1>, vector<8x128xf32>
    %c0_7 = arith.constant 0 : index
    %c0_8 = arith.constant 0 : index
    %26 = vector.load %arg2[%c0_7, %c0_8] : memref<8x128xf32, #tpu.memory_space<vmem>>, vector<8x128xf32>
    tpu.vector_store %arg2[%c0_7, %c0_8], %25 {strides = array<i32>} : memref<8x128xf32, #tpu.memory_space<vmem>>, vector<8x128xf32>,
    return
  }
  func.func @transform_0(%arg0: i32) -> (i32, i32) {
    %c0_i32 = arith.constant 0 : i32
    %c0_i32_0 = arith.constant 0 : i32
    return %arg0, %c0_i32 : i32, i32
  }
  func.func @transform_1(%arg0: i32) -> (i32, i32) {
    %c0_i32 = arith.constant 0 : i32
    %c0_i32_0 = arith.constant 0 : i32
    return %arg0, %c0_i32 : i32, i32
  }
}

</mosaic_0001>

<llo_original>
// kernel: tpu_custom_call.1
$region0: #{tpu_custom_call.1}
  #allocation0 [shape = 'u32[]', space=smem, size = 0x4, offset = 0x4, fixed_abs, tag = 'smem constant byte address 0x4 - core index']
  #allocation1 [shape = 'u32[72,128]{1,0:T(1,128)}', space=vmem, size = 0x9000, scoped, tag = 'internal scratch']
  %s0 = inlined_call_operand.hbm [shape: f32[8,128], index: 0, kind: input, shape index: {}]
  %s1 = inlined_call_operand.hbm [shape: f32[8,128], index: 1, kind: output, shape index: {}]
  %s2 = sld [smem:[#allocation0]]
  $region18: #{tpu_custom_call.1} parent=0
    _
  %s4 = ssub.s32 1, %s2
  %s5 = scalar_select 0, %s4, %s2
  $region1: #{tpu_custom_call.1} parent=0
    #allocation2 [shape = 'u8[4096]{0}', space=vmem, size = 0x1000, scoped, tag = 'input window, operand 0, single buffered']
    #allocation3 [shape = 's32[1]{0}', space=sflag, size = 0x4, scoped, tag = 'scoped memory for tpu_custom_call.1']
    #allocation4 [shape = 's32[1]{0}', space=sflag, size = 0x4, scoped, tag = 'scoped memory for tpu_custom_call.1']
    #allocation5 [shape = 'u8[4096]{0}', space=vmem, size = 0x1000, scoped, tag = 'output window, operand 0, single buffered']
    %6 = vsyncpa [#allocation3], 0
    %7 = vsyncpa [#allocation4], 0
    // Predicated region
    $region2: #{tpu_custom_call.1} parent=1 // pred_check
      _
    $region3: #{tpu_custom_call.1} parent=1 // pred_check_branch
      %9 = sbr.rel (0) target = $region5
    $region4: #{tpu_custom_call.1} parent=1 // pred_region
      %11 = vsyncadd [#allocation3], 0
      %s13 = sshll.u32 %s0, 4
      %s14 = int_to_ptr.hbm [resolvable:$true] %s13
      %s15 = sshll.u32 [#allocation2], 4
      %s16 = int_to_ptr.vmem [resolvable:$true] %s15
      %18 = dma.hbm_to_vmem [thread:$0]  %s14, 128, %s16, [#allocation3]
    $region5: #{tpu_custom_call.1} parent=1 // pred_fallthru
      _
    // Predicated region
    $region6: #{tpu_custom_call.1} parent=1 // pred_check
      _
    $region7: #{tpu_custom_call.1} parent=1 // pred_check_branch
      %20 = sbr.rel (0) target = $region9
    $region8: #{tpu_custom_call.1} parent=1 // pred_region
      %22 = dma.done [#allocation3], 128
    $region9: #{tpu_custom_call.1} parent=1 // pred_fallthru
      _
    %v23 = vld [vmem:[#allocation2] sm:$0xff]
    %v24 = vrcp.pop %v23
    %v25 = vmul.f32 %v23, %v24
    %v26 = vsub.f32 2.0, %v25
    %v27 = vmul.f32 %v24, %v26
    %v28 = vmul.f32 %v23, %v27
    %v29 = vsub.f32 2.0, %v28
    %v30 = vmul.f32 %v27, %v29
    %v31 = vmul.f32 %v23, %v23
    %v32 = vmul.f32 %v31, %v31
    %v33 = vmul.f32 %v23, %v32
    %v34 = vmul.f32 %v23, -21.0
    %v35 = vadd.f32 %v34, 48.0
    %v36 = vmul.f32 %v23, %v35
    %v37 = vadd.f32 %v36, -28.0
    %v38 = vmul.f32 %v33, %v37
    %v39 = vadd.f32 %v30, %v38
    %vm40 = vcmp.lt.f32.partialorder %v23, 1.0
    %v41 = vsel %vm40, %v39, 0.0
    %42 = vst [vmem:[#allocation5] sm:$0xff] %v41
    // Predicated region
    $region10: #{tpu_custom_call.1} parent=1 // pred_check
      _
    $region11: #{tpu_custom_call.1} parent=1 // pred_check_branch
      %44 = sbr.rel (0) target = $region13
    $region12: #{tpu_custom_call.1} parent=1 // pred_region
      %46 = vsyncadd [#allocation4], 0
      %s48 = sshll.u32 [#allocation5], 4
      %s49 = int_to_ptr.vmem [resolvable:$true] %s48
      %s50 = sshll.u32 %s1, 4
      %s51 = int_to_ptr.hbm [resolvable:$true] %s50
      %53 = dma.vmem_to_hbm [thread:$0]  %s49, 128, %s51, [#allocation4]
    $region13: #{tpu_custom_call.1} parent=1 // pred_fallthru
      _
    // Predicated region
    $region14: #{tpu_custom_call.1} parent=1 // pred_check
      _
    $region15: #{tpu_custom_call.1} parent=1 // pred_check_branch
      %55 = sbr.rel (0) target = $region17
    $region16: #{tpu_custom_call.1} parent=1 // pred_region
      %57 = dma.done [#allocation4], 128
    $region17: #{tpu_custom_call.1} parent=1 // pred_fallthru
      _
    %58 = vsyncpa [#allocation3], 1
    %59 = vsyncpa [#allocation4], 1

</llo_original>
